<compile_context>
chip_gen: v7x
topology: tpu7x:2x2x1
jax: 0.10.0
libtpu: 0.0.40
codegen_flags: <defaults>
</compile_context>

<pallas_src>
import functools

import jax
import jax.numpy as jnp
from jax import lax
from jax.experimental import pallas as pl
from jax.experimental.pallas import tpu as pltpu


# -----------------------------------------------------------------------------
# Fused kernel: all losses in one invocation.
#   out layout (SMEM, (1,5) f32): [main, global, local, attention_reg, total]
# -----------------------------------------------------------------------------
def _combined_loss_kernel(
    e1m_ref, e2m_ref,        # embedding1 / embedding2          (B, D)
    e1g_ref, e2g_ref,        # global_features1 / 2             (B, D)
    e1l_ref, e2l_ref,        # local_features1 / 2              (B, D)
    lab_ref,                 # labels                           (B, 1)
    a1_ref, a2_ref,          # flattened attention maps         (B, HW)
    out_ref,                 # (1, 5) f32 SMEM
    *,
    margin,
    weight_global,
    weight_local,
    attention_reg_weight,
    sparsity_weight,
    diversity_weight,
):
    lab = lab_ref[...].astype(jnp.float32)          # (B, 1)
    one_minus_lab = 1.0 - lab
    inv_b = 1.0 / lab.shape[0]                      # static python float

    # --- contrastive: mean( y*d^2 + (1-y)*relu(margin-d)^2 ),
    #     d = ||e1 - e2 + 1e-6||_2  (matches F.pairwise_distance eps) ---------
    def contrastive(e1_ref, e2_ref):
        e1 = e1_ref[...].astype(jnp.float32)
        e2 = e2_ref[...].astype(jnp.float32)
        diff = e1 - e2 + 1e-6
        sq = jnp.sum(diff * diff, axis=1, keepdims=True)       # (B, 1) = d^2
        dist = jnp.sqrt(sq)                                     # (B, 1)
        pos = lab * sq
        neg = one_minus_lab * jnp.square(jnp.maximum(margin - dist, 0.0))
        return jnp.sum(pos + neg) * inv_b

    main_l = contrastive(e1m_ref, e2m_ref)
    glob_l = contrastive(e1g_ref, e2g_ref)
    loc_l = contrastive(e1l_ref, e2l_ref)

    # --- attention regularization on the (virtually) concatenated maps -------
    a1 = a1_ref[...].astype(jnp.float32)            # (B, HW)
    a2 = a2_ref[...].astype(jnp.float32)            # (B, HW)
    m = a1.shape[0] + a2.shape[0]                   # M = 2B (static)

    # sparsity = mean_b( sum_hw A[b] )
    sparsity = (jnp.sum(a1) + jnp.sum(a2)) * (1.0 / m)

    # row-normalize (torch cosine_similarity: each row norm clamped to eps=1e-8)
    def normalize(a):
        sq = jnp.sum(a * a, axis=1, keepdims=True)              # lane reduction
        inv = lax.rsqrt(jnp.maximum(sq, 1e-16))                 # == 1/max(||a||,1e-8)
        return a * inv

    an1 = normalize(a1)
    an2 = normalize(a2)

    # off-diagonal cosine sum without forming the (M,M) sim matrix:
    #   sum_{i!=j} an_i . an_j = ||sum_i an_i||^2 - sum_i ||an_i||^2
    s = jnp.sum(an1, axis=0, keepdims=True) + jnp.sum(an2, axis=0, keepdims=True)
    diag_sum = jnp.sum(an1 * an1) + jnp.sum(an2 * an2)
    off_sum = jnp.sum(s * s) - diag_sum
    diversity = off_sum * (1.0 / (m * (m - 1)))

    attn_reg = sparsity_weight * sparsity + diversity_weight * diversity

    # total matches the PyTorch reference (main is reported but not in total)
    total = (
        weight_global * glob_l
        + weight_local * loc_l
        + attention_reg_weight * attn_reg
    )

    out_ref[0, 0] = main_l
    out_ref[0, 1] = glob_l
    out_ref[0, 2] = loc_l
    out_ref[0, 3] = attn_reg
    out_ref[0, 4] = total


# -----------------------------------------------------------------------------
# CombinedLoss forward (loss_type='contrastive') — single pallas_call
# -----------------------------------------------------------------------------
def combined_loss(
    outputs,
    labels,
    *,
    margin=1.0,
    weight_global=0.6,
    weight_local=0.4,
    attention_reg_weight=0.01,
    sparsity_weight=0.01,
    diversity_weight=0.01,
):
    # TODO(synk): only the loss_type='contrastive' branch of CombinedLoss is
    # implemented (the 'triplet' branch is not exercised by this module config).
    e1m, e2m = outputs["embedding1"], outputs["embedding2"]
    e1g, e2g = outputs["global_features1"], outputs["global_features2"]
    e1l, e2l = outputs["local_features1"], outputs["local_features2"]
    B = e1m.shape[0]

    lab = labels.reshape(B, 1)                          # cast happens in-kernel
    a1 = outputs["attention_map1"].reshape(B, -1)       # (B, H*W), contiguous
    a2 = outputs["attention_map2"].reshape(B, -1)

    kernel = functools.partial(
        _combined_loss_kernel,
        margin=margin,
        weight_global=weight_global,
        weight_local=weight_local,
        attention_reg_weight=attention_reg_weight,
        sparsity_weight=sparsity_weight,
        diversity_weight=diversity_weight,
    )
    vmem = pl.BlockSpec(memory_space=pltpu.MemorySpace.VMEM)

    out = pl.pallas_call(
        kernel,
        out_shape=jax.ShapeDtypeStruct((1, 5), jnp.float32),
        in_specs=[vmem] * 9,
        out_specs=pl.BlockSpec(memory_space=pltpu.MemorySpace.SMEM),
    )(e1m, e2m, e1g, e2g, e1l, e2l, lab, a1, a2)

    return {
        "main": out[0, 0],
        "global": out[0, 1],
        "local": out[0, 2],
        "attention_reg": out[0, 3],
        "total": out[0, 4],
    }


# -----------------------------------------------------------------------------
# Pure-JAX reference (mirrors the PyTorch module) for a correctness check.
# -----------------------------------------------------------------------------
def _reference_combined_loss(
    outputs,
    labels,
    margin=1.0,
    weight_global=0.6,
    weight_local=0.4,
    attention_reg_weight=0.01,
    sparsity_weight=0.01,
    diversity_weight=0.01,
):
    def contrastive(e1, e2, lab):
        diff = e1 - e2 + 1e-6
        d = jnp.sqrt(jnp.sum(diff * diff, axis=1))
        return jnp.mean(lab * d**2 + (1.0 - lab) * jnp.maximum(margin - d, 0.0) ** 2)

    main = contrastive(outputs["embedding1"], outputs["embedding2"], labels)
    glob = contrastive(outputs["global_features1"], outputs["global_features2"], labels)
    loc = contrastive(outputs["local_features1"], outputs["local_features2"], labels)

    A = jnp.concatenate([outputs["attention_map1"], outputs["attention_map2"]], axis=0)
    M = A.shape[0]
    flat = A.reshape(M, -1)
    sparsity = jnp.mean(jnp.sum(flat, axis=1))
    norms = jnp.maximum(jnp.sqrt(jnp.sum(flat * flat, axis=1, keepdims=True)), 1e-8)
    an = flat / norms
    sim = an @ an.T
    mask = ~jnp.eye(M, dtype=bool)
    diversity = jnp.sum(jnp.where(mask, sim, 0.0)) / (M * (M - 1))
    attn = sparsity_weight * sparsity + diversity_weight * diversity
    total = weight_global * glob + weight_local * loc + attention_reg_weight * attn
    return {"main": main, "global": glob, "local": loc, "attention_reg": attn, "total": total}


if __name__ == "__main__":
    key = jax.random.PRNGKey(0)
    B, D, H, W = 2, 32, 16, 16
    ks = jax.random.split(key, 8)

    outputs = {
        "embedding1": jax.random.normal(ks[0], (B, D), jnp.float32),
        "embedding2": jax.random.normal(ks[1], (B, D), jnp.float32),
        "global_features1": jax.random.normal(ks[2], (B, D), jnp.float32),
        "global_features2": jax.random.normal(ks[3], (B, D), jnp.float32),
        "local_features1": jax.random.normal(ks[4], (B, D), jnp.float32),
        "local_features2": jax.random.normal(ks[5], (B, D), jnp.float32),
        # attention maps in NCHW, non-negative like sigmoid/softmax outputs
        "attention_map1": jax.nn.sigmoid(jax.random.normal(ks[6], (B, 1, H, W), jnp.float32)),
        "attention_map2": jax.nn.sigmoid(jax.random.normal(ks[7], (B, 1, H, W), jnp.float32)),
    }
    labels = jnp.array([1.0, 0.0], dtype=jnp.float32)  # 1 = same person, 0 = different

    combined_loss_jit = jax.jit(combined_loss)
    losses = combined_loss_jit(outputs, labels)
    losses = jax.tree_util.tree_map(jax.block_until_ready, losses)

    ref = _reference_combined_loss(outputs, labels)
    for k in ("main", "global", "local", "attention_reg", "total"):
        got, want = float(losses[k]), float(ref[k])
        assert abs(got - want) <= 1e-4 * max(1.0, abs(want)), (k, got, want)

    print("KERNEL_OK")
</pallas_src>

<mosaic_0001>
module attributes {stable_mosaic.version = 11 : i64} {
  func.func @_combined_loss_kernel(%arg0: memref<2x32xf32, #tpu.memory_space<vmem>>, %arg1: memref<2x32xf32, #tpu.memory_space<vmem>>, %arg2: memref<2x32xf32, #tpu.memory_space<vmem>>, %arg3: memref<2x32xf32, #tpu.memory_space<vmem>>, %arg4: memref<2x32xf32, #tpu.memory_space<vmem>>, %arg5: memref<2x32xf32, #tpu.memory_space<vmem>>, %arg6: memref<2x1xf32, #tpu.memory_space<vmem>>, %arg7: memref<2x256xf32, #tpu.memory_space<vmem>>, %arg8: memref<2x256xf32, #tpu.memory_space<vmem>>, %arg9: memref<1x5xf32, #tpu.memory_space<smem>>) attributes {dimension_semantics = [], scalar_prefetch = 0 : i64, scratch_operands = 0 : i64, tpu.core_type = #tpu.core_type<tc>} {
    %c0 = arith.constant 0 : index
    %c0_0 = arith.constant 0 : index
    %0 = vector.load %arg6[%c0, %c0_0] : memref<2x1xf32, #tpu.memory_space<vmem>>, vector<2x1xf32>
    %cst = arith.constant 1.000000e+00 : f32
    %1 = vector.broadcast %cst : f32 to vector<2x1xf32>
    %2 = arith.subf %1, %0 : vector<2x1xf32>
    %c0_1 = arith.constant 0 : index
    %c0_2 = arith.constant 0 : index
    %3 = vector.load %arg0[%c0_1, %c0_2] : memref<2x32xf32, #tpu.memory_space<vmem>>, vector<2x32xf32>
    %c0_3 = arith.constant 0 : index
    %c0_4 = arith.constant 0 : index
    %4 = vector.load %arg1[%c0_3, %c0_4] : memref<2x32xf32, #tpu.memory_space<vmem>>, vector<2x32xf32>
    %5 = arith.subf %3, %4 : vector<2x32xf32>
    %cst_5 = arith.constant 9.99999997E-7 : f32
    %6 = vector.broadcast %cst_5 : f32 to vector<2x32xf32>
    %7 = arith.addf %5, %6 : vector<2x32xf32>
    %8 = arith.mulf %7, %7 : vector<2x32xf32>
    %cst_6 = arith.constant dense<0.000000e+00> : vector<2xf32>
    %9 = vector.multi_reduction <add>, %8, %cst_6 [1] : vector<2x32xf32> to vector<2xf32>
    %10 = vector.shape_cast %9 : vector<2xf32> to vector<2x1xf32>
    %11 = math.sqrt %10 : vector<2x1xf32>
    %12 = arith.mulf %0, %10 : vector<2x1xf32>
    %cst_7 = arith.constant 1.000000e+00 : f32
    %13 = vector.broadcast %cst_7 : f32 to vector<2x1xf32>
    %14 = arith.subf %13, %11 : vector<2x1xf32>
    %cst_8 = arith.constant 0.000000e+00 : f32
    %15 = vector.broadcast %cst_8 : f32 to vector<2x1xf32>
    %16 = arith.maximumf %14, %15 : vector<2x1xf32>
    %17 = arith.mulf %16, %16 : vector<2x1xf32>
    %18 = arith.mulf %2, %17 : vector<2x1xf32>
    %19 = arith.addf %12, %18 : vector<2x1xf32>
    %20 = vector.shape_cast %19 : vector<2x1xf32> to vector<1x2x1xf32>
    %cst_9 = arith.constant dense<0.000000e+00> : vector<1xf32>
    %21 = vector.multi_reduction <add>, %20, %cst_9 [1, 2] : vector<1x2x1xf32> to vector<1xf32>
    %22 = vector.shape_cast %21 : vector<1xf32> to vector<1x1x1xf32>
    %23 = vector.extract %22[0, 0, 0] : f32 from vector<1x1x1xf32>
    %cst_10 = arith.constant 5.000000e-01 : f32
    %24 = arith.mulf %23, %cst_10 : f32
    %c0_11 = arith.constant 0 : index
    %c0_12 = arith.constant 0 : index
    %25 = vector.load %arg2[%c0_11, %c0_12] : memref<2x32xf32, #tpu.memory_space<vmem>>, vector<2x32xf32>
    %c0_13 = arith.constant 0 : index
    %c0_14 = arith.constant 0 : index
    %26 = vector.load %arg3[%c0_13, %c0_14] : memref<2x32xf32, #tpu.memory_space<vmem>>, vector<2x32xf32>
    %27 = arith.subf %25, %26 : vector<2x32xf32>
    %cst_15 = arith.constant 9.99999997E-7 : f32
    %28 = vector.broadcast %cst_15 : f32 to vector<2x32xf32>
    %29 = arith.addf %27, %28 : vector<2x32xf32>
    %30 = arith.mulf %29, %29 : vector<2x32xf32>
    %cst_16 = arith.constant dense<0.000000e+00> : vector<2xf32>
    %31 = vector.multi_reduction <add>, %30, %cst_16 [1] : vector<2x32xf32> to vector<2xf32>
    %32 = vector.shape_cast %31 : vector<2xf32> to vector<2x1xf32>
    %33 = math.sqrt %32 : vector<2x1xf32>
    %34 = arith.mulf %0, %32 : vector<2x1xf32>
    %cst_17 = arith.constant 1.000000e+00 : f32
    %35 = vector.broadcast %cst_17 : f32 to vector<2x1xf32>
    %36 = arith.subf %35, %33 : vector<2x1xf32>
    %cst_18 = arith.constant 0.000000e+00 : f32
    %37 = vector.broadcast %cst_18 : f32 to vector<2x1xf32>
    %38 = arith.maximumf %36, %37 : vector<2x1xf32>
    %39 = arith.mulf %38, %38 : vector<2x1xf32>
    %40 = arith.mulf %2, %39 : vector<2x1xf32>
    %41 = arith.addf %34, %40 : vector<2x1xf32>
    %42 = vector.shape_cast %41 : vector<2x1xf32> to vector<1x2x1xf32>
    %cst_19 = arith.constant dense<0.000000e+00> : vector<1xf32>
    %43 = vector.multi_reduction <add>, %42, %cst_19 [1, 2] : vector<1x2x1xf32> to vector<1xf32>
    %44 = vector.shape_cast %43 : vector<1xf32> to vector<1x1x1xf32>
    %45 = vector.extract %44[0, 0, 0] : f32 from vector<1x1x1xf32>
    %cst_20 = arith.constant 5.000000e-01 : f32
    %46 = arith.mulf %45, %cst_20 : f32
    %c0_21 = arith.constant 0 : index
    %c0_22 = arith.constant 0 : index
    %47 = vector.load %arg4[%c0_21, %c0_22] : memref<2x32xf32, #tpu.memory_space<vmem>>, vector<2x32xf32>
    %c0_23 = arith.constant 0 : index
    %c0_24 = arith.constant 0 : index
    %48 = vector.load %arg5[%c0_23, %c0_24] : memref<2x32xf32, #tpu.memory_space<vmem>>, vector<2x32xf32>
    %49 = arith.subf %47, %48 : vector<2x32xf32>
    %cst_25 = arith.constant 9.99999997E-7 : f32
    %50 = vector.broadcast %cst_25 : f32 to vector<2x32xf32>
    %51 = arith.addf %49, %50 : vector<2x32xf32>
    %52 = arith.mulf %51, %51 : vector<2x32xf32>
    %cst_26 = arith.constant dense<0.000000e+00> : vector<2xf32>
    %53 = vector.multi_reduction <add>, %52, %cst_26 [1] : vector<2x32xf32> to vector<2xf32>
    %54 = vector.shape_cast %53 : vector<2xf32> to vector<2x1xf32>
    %55 = math.sqrt %54 : vector<2x1xf32>
    %56 = arith.mulf %0, %54 : vector<2x1xf32>
    %cst_27 = arith.constant 1.000000e+00 : f32
    %57 = vector.broadcast %cst_27 : f32 to vector<2x1xf32>
    %58 = arith.subf %57, %55 : vector<2x1xf32>
    %cst_28 = arith.constant 0.000000e+00 : f32
    %59 = vector.broadcast %cst_28 : f32 to vector<2x1xf32>
    %60 = arith.maximumf %58, %59 : vector<2x1xf32>
    %61 = arith.mulf %60, %60 : vector<2x1xf32>
    %62 = arith.mulf %2, %61 : vector<2x1xf32>
    %63 = arith.addf %56, %62 : vector<2x1xf32>
    %64 = vector.shape_cast %63 : vector<2x1xf32> to vector<1x2x1xf32>
    %cst_29 = arith.constant dense<0.000000e+00> : vector<1xf32>
    %65 = vector.multi_reduction <add>, %64, %cst_29 [1, 2] : vector<1x2x1xf32> to vector<1xf32>
    %66 = vector.shape_cast %65 : vector<1xf32> to vector<1x1x1xf32>
    %67 = vector.extract %66[0, 0, 0] : f32 from vector<1x1x1xf32>
    %cst_30 = arith.constant 5.000000e-01 : f32
    %68 = arith.mulf %67, %cst_30 : f32
    %c0_31 = arith.constant 0 : index
    %c0_32 = arith.constant 0 : index
    %69 = vector.load %arg7[%c0_31, %c0_32] : memref<2x256xf32, #tpu.memory_space<vmem>>, vector<2x256xf32>
    %c0_33 = arith.constant 0 : index
    %c0_34 = arith.constant 0 : index
    %70 = vector.load %arg8[%c0_33, %c0_34] : memref<2x256xf32, #tpu.memory_space<vmem>>, vector<2x256xf32>
    %71 = vector.shape_cast %69 : vector<2x256xf32> to vector<1x2x256xf32>
    %cst_35 = arith.constant dense<0.000000e+00> : vector<1xf32>
    %72 = vector.multi_reduction <add>, %71, %cst_35 [1, 2] : vector<1x2x256xf32> to vector<1xf32>
    %73 = vector.shape_cast %72 : vector<1xf32> to vector<1x1x1xf32>
    %74 = vector.extract %73[0, 0, 0] : f32 from vector<1x1x1xf32>
    %75 = vector.shape_cast %70 : vector<2x256xf32> to vector<1x2x256xf32>
    %cst_36 = arith.constant dense<0.000000e+00> : vector<1xf32>
    %76 = vector.multi_reduction <add>, %75, %cst_36 [1, 2] : vector<1x2x256xf32> to vector<1xf32>
    %77 = vector.shape_cast %76 : vector<1xf32> to vector<1x1x1xf32>
    %78 = vector.extract %77[0, 0, 0] : f32 from vector<1x1x1xf32>
    %79 = arith.addf %74, %78 : f32
    %cst_37 = arith.constant 2.500000e-01 : f32
    %80 = arith.mulf %79, %cst_37 : f32
    %81 = arith.mulf %69, %69 : vector<2x256xf32>
    %cst_38 = arith.constant dense<0.000000e+00> : vector<2xf32>
    %82 = vector.multi_reduction <add>, %81, %cst_38 [1] : vector<2x256xf32> to vector<2xf32>
    %83 = vector.shape_cast %82 : vector<2xf32> to vector<2x1xf32>
    %cst_39 = arith.constant 1.000000e-16 : f32
    %84 = vector.broadcast %cst_39 : f32 to vector<2x1xf32>
    %85 = arith.maximumf %83, %84 : vector<2x1xf32>
    %86 = math.rsqrt %85 : vector<2x1xf32>
    %87 = vector.broadcast %86 : vector<2x1xf32> to vector<2x256xf32>
    %88 = arith.mulf %69, %87 : vector<2x256xf32>
    %89 = arith.mulf %70, %70 : vector<2x256xf32>
    %cst_40 = arith.constant dense<0.000000e+00> : vector<2xf32>
    %90 = vector.multi_reduction <add>, %89, %cst_40 [1] : vector<2x256xf32> to vector<2xf32>
    %91 = vector.shape_cast %90 : vector<2xf32> to vector<2x1xf32>
    %cst_41 = arith.constant 1.000000e-16 : f32
    %92 = vector.broadcast %cst_41 : f32 to vector<2x1xf32>
    %93 = arith.maximumf %91, %92 : vector<2x1xf32>
    %94 = math.rsqrt %93 : vector<2x1xf32>
    %95 = vector.broadcast %94 : vector<2x1xf32> to vector<2x256xf32>
    %96 = arith.mulf %70, %95 : vector<2x256xf32>
    %cst_42 = arith.constant dense<0.000000e+00> : vector<256xf32>
    %97 = vector.multi_reduction <add>, %88, %cst_42 [0] : vector<2x256xf32> to vector<256xf32>
    %98 = vector.shape_cast %97 : vector<256xf32> to vector<1x256xf32>
    %cst_43 = arith.constant dense<0.000000e+00> : vector<256xf32>
    %99 = vector.multi_reduction <add>, %96, %cst_43 [0] : vector<2x256xf32> to vector<256xf32>
    %100 = vector.shape_cast %99 : vector<256xf32> to vector<1x256xf32>
    %101 = arith.addf %98, %100 : vector<1x256xf32>
    %102 = arith.mulf %88, %88 : vector<2x256xf32>
    %103 = vector.shape_cast %102 : vector<2x256xf32> to vector<1x2x256xf32>
    %cst_44 = arith.constant dense<0.000000e+00> : vector<1xf32>
    %104 = vector.multi_reduction <add>, %103, %cst_44 [1, 2] : vector<1x2x256xf32> to vector<1xf32>
    %105 = vector.shape_cast %104 : vector<1xf32> to vector<1x1x1xf32>
    %106 = vector.extract %105[0, 0, 0] : f32 from vector<1x1x1xf32>
    %107 = arith.mulf %96, %96 : vector<2x256xf32>
    %108 = vector.shape_cast %107 : vector<2x256xf32> to vector<1x2x256xf32>
    %cst_45 = arith.constant dense<0.000000e+00> : vector<1xf32>
    %109 = vector.multi_reduction <add>, %108, %cst_45 [1, 2] : vector<1x2x256xf32> to vector<1xf32>
    %110 = vector.shape_cast %109 : vector<1xf32> to vector<1x1x1xf32>
    %111 = vector.extract %110[0, 0, 0] : f32 from vector<1x1x1xf32>
    %112 = arith.addf %106, %111 : f32
    %113 = arith.mulf %101, %101 : vector<1x256xf32>
    %114 = vector.shape_cast %113 : vector<1x256xf32> to vector<1x1x256xf32>
    %cst_46 = arith.constant dense<0.000000e+00> : vector<1xf32>
    %115 = vector.multi_reduction <add>, %114, %cst_46 [1, 2] : vector<1x1x256xf32> to vector<1xf32>
    %116 = vector.shape_cast %115 : vector<1xf32> to vector<1x1x1xf32>
    %117 = vector.extract %116[0, 0, 0] : f32 from vector<1x1x1xf32>
    %118 = arith.subf %117, %112 : f32
    %cst_47 = arith.constant 0.0833333358 : f32
    %119 = arith.mulf %118, %cst_47 : f32
    %cst_48 = arith.constant 0.00999999977 : f32
    %120 = arith.mulf %cst_48, %80 : f32
    %cst_49 = arith.constant 0.00999999977 : f32
    %121 = arith.mulf %cst_49, %119 : f32
    %122 = arith.addf %120, %121 : f32
    %cst_50 = arith.constant 6.000000e-01 : f32
    %123 = arith.mulf %cst_50, %46 : f32
    %cst_51 = arith.constant 4.000000e-01 : f32
    %124 = arith.mulf %cst_51, %68 : f32
    %125 = arith.addf %123, %124 : f32
    %cst_52 = arith.constant 0.00999999977 : f32
    %126 = arith.mulf %cst_52, %122 : f32
    %127 = arith.addf %125, %126 : f32
    %c0_53 = arith.constant 0 : index
    %c0_54 = arith.constant 0 : index
    %128 = memref.load %arg9[%c0_53, %c0_54] : memref<1x5xf32, #tpu.memory_space<smem>>
    memref.store %24, %arg9[%c0_53, %c0_54] : memref<1x5xf32, #tpu.memory_space<smem>>
    %c0_55 = arith.constant 0 : index
    %c1 = arith.constant 1 : index
    %129 = memref.load %arg9[%c0_55, %c1] : memref<1x5xf32, #tpu.memory_space<smem>>
    memref.store %46, %arg9[%c0_55, %c1] : memref<1x5xf32, #tpu.memory_space<smem>>
    %c0_56 = arith.constant 0 : index
    %c2 = arith.constant 2 : index
    %130 = memref.load %arg9[%c0_56, %c2] : memref<1x5xf32, #tpu.memory_space<smem>>
    memref.store %68, %arg9[%c0_56, %c2] : memref<1x5xf32, #tpu.memory_space<smem>>
    %c0_57 = arith.constant 0 : index
    %c3 = arith.constant 3 : index
    %131 = memref.load %arg9[%c0_57, %c3] : memref<1x5xf32, #tpu.memory_space<smem>>
    memref.store %122, %arg9[%c0_57, %c3] : memref<1x5xf32, #tpu.memory_space<smem>>
    %c0_58 = arith.constant 0 : index
    %c4 = arith.constant 4 : index
    %132 = memref.load %arg9[%c0_58, %c4] : memref<1x5xf32, #tpu.memory_space<smem>>
    memref.store %127, %arg9[%c0_58, %c4] : memref<1x5xf32, #tpu.memory_space<smem>>
    return
  }
}

</mosaic_0001>

<llo_original>
// kernel: combined_loss.1
$region0: #{combined_loss.1}
  #allocation0 [shape = 'u32[]', space=smem, size = 0x4, offset = 0x4, fixed_abs, tag = 'smem constant byte address 0x4 - core index']
  #allocation1 [shape = 'u32[144,128]{1,0:T(1,128)}', space=vmem, size = 0x12000, scoped, tag = 'internal scratch']
  %s0 = inlined_call_operand.vmem [shape: f32[2,32], index: 0, kind: input, shape index: {}]
  %s1 = inlined_call_operand.vmem [shape: f32[2,32], index: 1, kind: input, shape index: {}]
  %s2 = inlined_call_operand.vmem [shape: f32[2,32], index: 2, kind: input, shape index: {}]
  %s3 = inlined_call_operand.vmem [shape: f32[2,32], index: 3, kind: input, shape index: {}]
  %s4 = inlined_call_operand.vmem [shape: f32[2,32], index: 4, kind: input, shape index: {}]
  %s5 = inlined_call_operand.vmem [shape: f32[2,32], index: 5, kind: input, shape index: {}]
  %s6 = inlined_call_operand.vmem [shape: f32[2,1], index: 6, kind: input, shape index: {}]
  %s7 = inlined_call_operand.vmem [shape: f32[2,256], index: 7, kind: input, shape index: {}]
  %s8 = inlined_call_operand.vmem [shape: f32[2,256], index: 8, kind: input, shape index: {}]
  %s9 = inlined_call_operand.vmem [shape: f32[1,5], index: 9, kind: output, shape index: {}]
  %s10 = sld [smem:[#allocation0]]
  $region46: #{combined_loss.1} parent=0
    _
  %s12 = ssub.s32 1, %s10
  %s13 = scalar_select 0, %s12, %s10
  $region1: #{combined_loss.1} parent=0
    #allocation2 [shape = 'u8[512]{0}', space=smem, size = 0x200, scoped, tag = 'output window, operand 0, single buffered']
    #allocation3 [shape = 's32[1]{0}', space=sflag, size = 0x4, scoped, tag = 'scoped memory for combined_loss.1']
    %14 = vsyncpa [#allocation3], 0
    // Predicated region
    $region2: #{combined_loss.1} parent=1 // pred_check
      _
    $region3: #{combined_loss.1} parent=1 // pred_check_branch
      %16 = sbr.rel (0) target = $region5
    $region4: #{combined_loss.1} parent=1 // pred_region
      _
    $region5: #{combined_loss.1} parent=1 // pred_fallthru
      _
    // Predicated region
    $region6: #{combined_loss.1} parent=1 // pred_check
      _
    $region7: #{combined_loss.1} parent=1 // pred_check_branch
      %18 = sbr.rel (0) target = $region9
    $region8: #{combined_loss.1} parent=1 // pred_region
      _
    $region9: #{combined_loss.1} parent=1 // pred_fallthru
      _
    // Predicated region
    $region10: #{combined_loss.1} parent=1 // pred_check
      _
    $region11: #{combined_loss.1} parent=1 // pred_check_branch
      %20 = sbr.rel (0) target = $region13
    $region12: #{combined_loss.1} parent=1 // pred_region
      _
    $region13: #{combined_loss.1} parent=1 // pred_fallthru
      _
    // Predicated region
    $region14: #{combined_loss.1} parent=1 // pred_check
      _
    $region15: #{combined_loss.1} parent=1 // pred_check_branch
      %22 = sbr.rel (0) target = $region17
    $region16: #{combined_loss.1} parent=1 // pred_region
      _
    $region17: #{combined_loss.1} parent=1 // pred_fallthru
      _
    // Predicated region
    $region18: #{combined_loss.1} parent=1 // pred_check
      _
    $region19: #{combined_loss.1} parent=1 // pred_check_branch
      %24 = sbr.rel (0) target = $region21
    $region20: #{combined_loss.1} parent=1 // pred_region
      _
    $region21: #{combined_loss.1} parent=1 // pred_fallthru
      _
    // Predicated region
    $region22: #{combined_loss.1} parent=1 // pred_check
      _
    $region23: #{combined_loss.1} parent=1 // pred_check_branch
      %26 = sbr.rel (0) target = $region25
    $region24: #{combined_loss.1} parent=1 // pred_region
      _
    $region25: #{combined_loss.1} parent=1 // pred_fallthru
      _
    // Predicated region
    $region26: #{combined_loss.1} parent=1 // pred_check
      _
    $region27: #{combined_loss.1} parent=1 // pred_check_branch
      %28 = sbr.rel (0) target = $region29
    $region28: #{combined_loss.1} parent=1 // pred_region
      _
    $region29: #{combined_loss.1} parent=1 // pred_fallthru
      _
    // Predicated region
    $region30: #{combined_loss.1} parent=1 // pred_check
      _
    $region31: #{combined_loss.1} parent=1 // pred_check_branch
      %30 = sbr.rel (0) target = $region33
    $region32: #{combined_loss.1} parent=1 // pred_region
      _
    $region33: #{combined_loss.1} parent=1 // pred_fallthru
      _
    // Predicated region
    $region34: #{combined_loss.1} parent=1 // pred_check
      _
    $region35: #{combined_loss.1} parent=1 // pred_check_branch
      %32 = sbr.rel (0) target = $region37
    $region36: #{combined_loss.1} parent=1 // pred_region
      _
    $region37: #{combined_loss.1} parent=1 // pred_fallthru
      _
    %v33 = vld [vmem:[%s6] sm:$0x3]
    %v34 = vsub.f32 1.0, %v33
    %v35 = vld [vmem:[%s0] sm:$0x3]
    %v36 = vld [vmem:[%s1] sm:$0x3]
    %v37 = vsub.f32 %v35, %v36
    %v38 = vadd.f32 %v37, 1e-06
    %v39 = vmul.f32 %v38, %v38
    %vm40 = vcmask 254976
    %v41 = vsel %vm40, %v39, 0.0
    %42 = vadd.xlane.f32.xlu0 %v41
    %v43 = vpop.xlane.xlu0 %42
    %v44 = vrsqrt.pop %v43
    %v45 = vmul.f32 %v43, %v44
    %vm46 = vcmp.eq.f32.partialorder %v43, inf
    %v47 = vsel %vm46, %v43, %v45
    %vm48 = vcmp.eq.f32.partialorder %v43, 0.0
    %v49 = vand.u32 %v43, 2147483648
    %v50 = vsel %vm48, %v49, %v47
    %v51 = vmul.f32 %v33, %v43
    %v52 = vsub.f32 1.0, %v50
    %v53 = vmax.f32 %v52, 0.0
    %v54 = vmul.f32 %v53, %v53
    %v55 = vmul.f32 %v34, %v54
    %v56 = vadd.f32 %v51, %v55
    %vm57 = vcmask 1024
    %v58 = vsel %vm57, %v56, 0.0
    %59 = vadd.xlane.f32.xlu0 %v58
    %v60 = vpop.xlane.xlu0 %59
    %v61 = vrot.slane %v60, 4
    %v62 = vadd.f32 %v60, %v61
    %v63 = vrot.slane %v62, 2
    %v64 = vadd.f32 %v62, %v63
    %v65 = vrot.slane %v64, 1
    %v66 = vadd.f32 %v64, %v65
    %s67 = vtos %v66
    %s68 = smul.f32 %s67, 0.5
    %v69 = vld [vmem:[%s2] sm:$0x3]
    %v70 = vld [vmem:[%s3] sm:$0x3]
    %v71 = vsub.f32 %v69, %v70
    %v72 = vadd.f32 %v71, 1e-06
    %v73 = vmul.f32 %v72, %v72
    %v74 = vsel %vm40, %v73, 0.0
    %75 = vadd.xlane.f32.xlu0 %v74
    %v76 = vpop.xlane.xlu0 %75
    %v77 = vrsqrt.pop %v76
    %v78 = vmul.f32 %v76, %v77
    %vm79 = vcmp.eq.f32.partialorder %v76, inf
    %v80 = vsel %vm79, %v76, %v78
    %vm81 = vcmp.eq.f32.partialorder %v76, 0.0
    %v82 = vand.u32 %v76, 2147483648
    %v83 = vsel %vm81, %v82, %v80
    %v84 = vmul.f32 %v33, %v76
    %v85 = vsub.f32 1.0, %v83
    %v86 = vmax.f32 %v85, 0.0
    %v87 = vmul.f32 %v86, %v86
    %v88 = vmul.f32 %v34, %v87
    %v89 = vadd.f32 %v84, %v88
    %v90 = vsel %vm57, %v89, 0.0
    %91 = vadd.xlane.f32.xlu0 %v90
    %v92 = vpop.xlane.xlu0 %91
    %v93 = vrot.slane %v92, 4
    %v94 = vadd.f32 %v92, %v93
    %v95 = vrot.slane %v94, 2
    %v96 = vadd.f32 %v94, %v95
    %v97 = vrot.slane %v96, 1
    %v98 = vadd.f32 %v96, %v97
    %s99 = vtos %v98
    %s100 = smul.f32 %s99, 0.5
    %v101 = vld [vmem:[%s4] sm:$0x3]
    %v102 = vld [vmem:[%s5] sm:$0x3]
    %v103 = vsub.f32 %v101, %v102
    %v104 = vadd.f32 %v103, 1e-06
    %v105 = vmul.f32 %v104, %v104
    %v106 = vsel %vm40, %v105, 0.0
    %107 = vadd.xlane.f32.xlu0 %v106
    %v108 = vpop.xlane.xlu0 %107
    %v109 = vrsqrt.pop %v108
    %v110 = vmul.f32 %v108, %v109
    %vm111 = vcmp.eq.f32.partialorder %v108, inf
    %v112 = vsel %vm111, %v108, %v110
    %vm113 = vcmp.eq.f32.partialorder %v108, 0.0
    %v114 = vand.u32 %v108, 2147483648
    %v115 = vsel %vm113, %v114, %v112
    %v116 = vmul.f32 %v33, %v108
    %v117 = vsub.f32 1.0, %v115
    %v118 = vmax.f32 %v117, 0.0
    %v119 = vmul.f32 %v118, %v118
    %v120 = vmul.f32 %v34, %v119
    %v121 = vadd.f32 %v116, %v120
    %v122 = vsel %vm57, %v121, 0.0
    %123 = vadd.xlane.f32.xlu0 %v122
    %v124 = vpop.xlane.xlu0 %123
    %v125 = vrot.slane %v124, 4
    %v126 = vadd.f32 %v124, %v125
    %v127 = vrot.slane %v126, 2
    %v128 = vadd.f32 %v126, %v127
    %v129 = vrot.slane %v128, 1
    %v130 = vadd.f32 %v128, %v129
    %s131 = vtos %v130
    %s132 = smul.f32 %s131, 0.5
    %v133 = vld [vmem:[%s7] sm:$0xf]
    %v134 = vld [vmem:[%s8] sm:$0xf]
    %v137 = vunpack.c.l.s4 1983009808
    %v138 = vunpack.c.0.s8 %v137
    %v139 = vlaneseq
    %v140 = vshrl.u32 %v139, 7
    %v141 = vsub.s32 %v138, %v140
    %v142 = vrot.slane %v133, %v141
    %v143 = vcombine.high %v142, %v142
    %vm146 = vcmask 1041408
    %v147 = vsel %vm146, %v142, 0.0
    %v148 = vsel %vm146, %v143, 0.0
    %v149 = vadd.f32 %v147, %v148
    %150 = vadd.xlane.f32.xlu0 %v149
    %v151 = vpop.xlane.xlu0 %150
    %v152 = vrot.slane %v151, 4
    %v153 = vadd.f32 %v151, %v152
    %v154 = vrot.slane %v153, 2
    %v155 = vadd.f32 %v153, %v154
    %v156 = vrot.slane %v155, 1
    %v157 = vadd.f32 %v155, %v156
    %s158 = vtos %v157
    %v161 = vunpack.c.l.s4 1983009808
    %v162 = vunpack.c.0.s8 %v161
    %v163 = vlaneseq
    %v164 = vshrl.u32 %v163, 7
    %v165 = vsub.s32 %v162, %v164
    %v166 = vrot.slane %v134, %v165
    %v167 = vcombine.high %v166, %v166
    %v170 = vsel %vm146, %v166, 0.0
    %v171 = vsel %vm146, %v167, 0.0
    %v172 = vadd.f32 %v170, %v171
    %173 = vadd.xlane.f32.xlu0 %v172
    %v174 = vpop.xlane.xlu0 %173
    %v175 = vrot.slane %v174, 4
    %v176 = vadd.f32 %v174, %v175
    %v177 = vrot.slane %v176, 2
    %v178 = vadd.f32 %v176, %v177
    %v179 = vrot.slane %v178, 1
    %v180 = vadd.f32 %v178, %v179
    %s181 = vtos %v180
    %s182 = sadd.f32 %s158, %s181
    %s183 = smul.f32 %s182, 0.25
    %v184 = vmul.f32 %v133, %v133
    %v187 = vunpack.c.l.s4 1983009808
    %v188 = vunpack.c.0.s8 %v187
    %v189 = vlaneseq
    %v190 = vshrl.u32 %v189, 7
    %v191 = vsub.s32 %v188, %v190
    %v192 = vrot.slane %v184, %v191
    %v193 = vcombine.high %v192, %v192
    %v196 = vsel %vm146, %v192, 0.0
    %v197 = vsel %vm146, %v193, 0.0
    %v198 = vadd.f32 %v196, %v197
    %199 = vadd.xlane.f32.xlu0 %v198
    %v200 = vpop.xlane.xlu0 %199
    %v201 = vmax.f32 %v200, 1e-16
    %v202 = vrsqrt.pop %v201
    %v205 = vunpack.c.l.s4 269488144
    %v206 = vunpack.c.0.s8 %v205
    %v207 = vlaneseq
    %v208 = vshrl.u32 %v207, 7
    %v209 = vsub.s32 %v206, %v208
    %v210 = vrot.slane %v202, %v209
    %v212 = vmul.f32 %v133, %v210
    %v213 = vmul.f32 %v134, %v134
    %v216 = vunpack.c.l.s4 1983009808
    %v217 = vunpack.c.0.s8 %v216
    %v218 = vlaneseq
    %v219 = vshrl.u32 %v218, 7
    %v220 = vsub.s32 %v217, %v219
    %v221 = vrot.slane %v213, %v220
    %v222 = vcombine.high %v221, %v221
    %v225 = vsel %vm146, %v221, 0.0
    %v226 = vsel %vm146, %v222, 0.0
    %v227 = vadd.f32 %v225, %v226
    %228 = vadd.xlane.f32.xlu0 %v227
    %v229 = vpop.xlane.xlu0 %228
    %v230 = vmax.f32 %v229, 1e-16
    %v231 = vrsqrt.pop %v230
    %v234 = vunpack.c.l.s4 269488144
    %v235 = vunpack.c.0.s8 %v234
    %v236 = vlaneseq
    %v237 = vshrl.u32 %v236, 7
    %v238 = vsub.s32 %v235, %v237
    %v239 = vrot.slane %v231, %v238
    %v241 = vmul.f32 %v134, %v239
    %v244 = vunpack.c.l.s4 1983009808
    %v245 = vunpack.c.0.s8 %v244
    %v246 = vlaneseq
    %v247 = vshrl.u32 %v246, 7
    %v248 = vsub.s32 %v245, %v247
    %v249 = vrot.slane %v212, %v248
    %v250 = vcombine.high %v249, %v249
    %v253 = vsel %vm146, %v249, 0.0
    %v254 = vrot.slane %v253, 4
    %v255 = vadd.f32 %v253, %v254
    %v256 = vrot.slane %v255, 2
    %v257 = vadd.f32 %v255, %v256
    %v258 = vrot.slane %v257, 1
    %v259 = vadd.f32 %v257, %v258
    %v260 = vsel %vm146, %v250, 0.0
    %v261 = vrot.slane %v260, 4
    %v262 = vadd.f32 %v260, %v261
    %v263 = vrot.slane %v262, 2
    %v264 = vadd.f32 %v262, %v263
    %v265 = vrot.slane %v264, 1
    %v266 = vadd.f32 %v264, %v265
    %v269 = vunpack.c.l.s4 1983009808
    %v270 = vunpack.c.0.s8 %v269
    %v271 = vlaneseq
    %v272 = vshrl.u32 %v271, 7
    %v273 = vsub.s32 %v270, %v272
    %v274 = vrot.slane %v241, %v273
    %v275 = vcombine.high %v274, %v274
    %v278 = vsel %vm146, %v274, 0.0
    %v279 = vrot.slane %v278, 4
    %v280 = vadd.f32 %v278, %v279
    %v281 = vrot.slane %v280, 2
    %v282 = vadd.f32 %v280, %v281
    %v283 = vrot.slane %v282, 1
    %v284 = vadd.f32 %v282, %v283
    %v285 = vsel %vm146, %v275, 0.0
    %v286 = vrot.slane %v285, 4
    %v287 = vadd.f32 %v285, %v286
    %v288 = vrot.slane %v287, 2
    %v289 = vadd.f32 %v287, %v288
    %v290 = vrot.slane %v289, 1
    %v291 = vadd.f32 %v289, %v290
    %v292 = vadd.f32 %v259, %v284
    %v293 = vadd.f32 %v266, %v291
    %v294 = vmul.f32 %v212, %v212
    %v297 = vunpack.c.l.s4 1983009808
    %v298 = vunpack.c.0.s8 %v297
    %v299 = vlaneseq
    %v300 = vshrl.u32 %v299, 7
    %v301 = vsub.s32 %v298, %v300
    %v302 = vrot.slane %v294, %v301
    %v303 = vcombine.high %v302, %v302
    %v306 = vsel %vm146, %v302, 0.0
    %v307 = vsel %vm146, %v303, 0.0
    %v308 = vadd.f32 %v306, %v307
    %309 = vadd.xlane.f32.xlu0 %v308
    %v310 = vpop.xlane.xlu0 %309
    %v311 = vrot.slane %v310, 4
    %v312 = vadd.f32 %v310, %v311
    %v313 = vrot.slane %v312, 2
    %v314 = vadd.f32 %v312, %v313
    %v315 = vrot.slane %v314, 1
    %v316 = vadd.f32 %v314, %v315
    %s317 = vtos %v316
    %v318 = vmul.f32 %v241, %v241
    %v321 = vunpack.c.l.s4 1983009808
    %v322 = vunpack.c.0.s8 %v321
    %v323 = vlaneseq
    %v324 = vshrl.u32 %v323, 7
    %v325 = vsub.s32 %v322, %v324
    %v326 = vrot.slane %v318, %v325
    %v327 = vcombine.high %v326, %v326
    %v330 = vsel %vm146, %v326, 0.0
    %v331 = vsel %vm146, %v327, 0.0
    %v332 = vadd.f32 %v330, %v331
    %333 = vadd.xlane.f32.xlu0 %v332
    %v334 = vpop.xlane.xlu0 %333
    %v335 = vrot.slane %v334, 4
    %v336 = vadd.f32 %v334, %v335
    %v337 = vrot.slane %v336, 2
    %v338 = vadd.f32 %v336, %v337
    %v339 = vrot.slane %v338, 1
    %v340 = vadd.f32 %v338, %v339
    %s341 = vtos %v340
    %s342 = sadd.f32 %s317, %s341
    %v343 = vmul.f32 %v292, %v292
    %v344 = vmul.f32 %v293, %v293
    %vm345 = vcmask 1040384
    %v346 = vsel %vm345, %v343, 0.0
    %v347 = vsel %vm345, %v344, 0.0
    %v348 = vadd.f32 %v346, %v347
    %349 = vadd.xlane.f32.xlu0 %v348
    %v350 = vpop.xlane.xlu0 %349
    %v351 = vrot.slane %v350, 4
    %v352 = vadd.f32 %v350, %v351
    %v353 = vrot.slane %v352, 2
    %v354 = vadd.f32 %v352, %v353
    %v355 = vrot.slane %v354, 1
    %v356 = vadd.f32 %v354, %v355
    %s357 = vtos %v356
    %s358 = ssub.f32 %s357, %s342
    %s359 = smul.f32 %s358, 0.083333336
    %s360 = smul.f32 %s183, 0.01
    %s361 = smul.f32 %s359, 0.01
    %s362 = sadd.f32 %s360, %s361
    %s363 = smul.f32 %s100, 0.6
    %s364 = smul.f32 %s132, 0.4
    %s365 = sadd.f32 %s363, %s364
    %s366 = smul.f32 %s362, 0.01
    %s367 = sadd.f32 %s365, %s366
    %s368 = scalar_lea.smem [#allocation2], 0
    %369 = sst [smem:[%s368]] %s68
    %s370 = scalar_lea.smem [#allocation2], 1
    %371 = sst [smem:[%s370]] %s100
    %s372 = scalar_lea.smem [#allocation2], 2
    %373 = sst [smem:[%s372]] %s132
    %s374 = scalar_lea.smem [#allocation2], 3
    %375 = sst [smem:[%s374]] %s362
    %s376 = scalar_lea.smem [#allocation2], 4
    %377 = sst [smem:[%s376]] %s367
    // Predicated region
    $region38: #{combined_loss.1} parent=1 // pred_check
      _
    $region39: #{combined_loss.1} parent=1 // pred_check_branch
      %379 = sbr.rel (0) target = $region41
    $region40: #{combined_loss.1} parent=1 // pred_region
      %s381 = ssub.s32 16, 16
      %382 = vsyncadd [#allocation3], %s381
      %s384 = sshll.u32 %s9, 4
      %s385 = int_to_ptr.vmem [resolvable:$true] %s384
      %387 = dma.smem_to_vmem [#allocation2], 16, %s385, [#allocation3]
    $region41: #{combined_loss.1} parent=1 // pred_fallthru
      _
    // Predicated region
    $region42: #{combined_loss.1} parent=1 // pred_check
      _
    $region43: #{combined_loss.1} parent=1 // pred_check_branch
      %389 = sbr.rel (0) target = $region45
    $region44: #{combined_loss.1} parent=1 // pred_region
      %390 = dma.done [#allocation3], 16
    $region45: #{combined_loss.1} parent=1 // pred_fallthru
      _
    %391 = sfence
    %392 = vsyncpa [#allocation3], 1

</llo_original>
